<compile_context>
chip_gen: v5e
topology: v5e:2x2
jax: 0.10.0
libtpu: 0.0.40
codegen_flags: <defaults>
</compile_context>

<pallas_src>
import functools

import numpy as np
import jax
import jax.numpy as jnp
from jax.experimental import pallas as pl
from jax.experimental.pallas import tpu as pltpu


LN_EPS = 1e-5
LANE = 128


def _round_up(x, m):
    return ((x + m - 1) // m) * m


def _nbytes(a):
    return int(np.prod(a.shape)) * jnp.dtype(a.dtype).itemsize


def transformer_kernel(emb_ref, wqkv_ref, bqkv_ref, wo_ref, bo_ref,
                       ln1g_ref, ln1b_ref, w1_ref, b1_ref, w2_ref, b2_ref,
                       ln2g_ref, ln2b_ref, wl_ref, bl_ref, out_ref,
                       *, d_model, mm_dtype):
    bt, slen, d_pad = emb_ref.shape
    a_pad = out_ref.shape[-1]
    inv_d = 1.0 / float(d_model)
    scale = 1.0 / float(np.sqrt(d_model))

    # Masked, lane-padded embeddings (mask already applied in the wrapper).
    # Flatten (bt, slen, Dp) -> (bt*slen, Dp): every per-token matmul presents
    # bt*slen rows to the MXU instead of slen.
    x = emb_ref[...].reshape(bt * slen, d_pad)

    def mm(a, b):
        return jnp.dot(a.astype(mm_dtype), b.astype(mm_dtype),
                       preferred_element_type=jnp.float32)

    # ---- fused QKV projection: one (T, Dp) @ (Dp, 3Dp) MXU call ----
    qkv = mm(x, wqkv_ref[...]) + bqkv_ref[...]
    q = qkv[:, :d_pad] * scale                      # fold 1/sqrt(D) into q once
    k = qkv[:, d_pad:2 * d_pad]
    v = qkv[:, 2 * d_pad:]

    qb = q.reshape(bt, slen, d_pad)
    kb = k.reshape(bt, slen, d_pad)
    vb = v.reshape(bt, slen, d_pad)

    # ---- single-head self-attention (no key-padding mask, as in the module) ----
    # Contract on the last dims directly; no explicit k.T / XLU transpose.
    s = jnp.einsum("bqd,bkd->bqk", qb.astype(mm_dtype), kb.astype(mm_dtype),
                   preferred_element_type=jnp.float32)               # (bt, S, S)
    s = s - jnp.max(s, axis=-1, keepdims=True)
    p = jnp.exp(s)
    p = p * pl.reciprocal(jnp.sum(p, axis=-1, keepdims=True), approx=True)

    attn = jnp.einsum("bqk,bkd->bqd", p.astype(mm_dtype), vb.astype(mm_dtype),
                      preferred_element_type=jnp.float32)             # (bt, S, Dp)
    attn = attn.reshape(bt * slen, d_pad)
    attn = mm(attn, wo_ref[...]) + bo_ref[...]

    def layer_norm(h, g, b):
        # Feature dim is zero-padded from d_model to d_pad. Sums over padded
        # lanes are unchanged (they are zero), so normalize with the true
        # feature count; zero-padded gamma/beta keep padded output lanes at 0.
        mu = jnp.sum(h, axis=-1, keepdims=True) * inv_d
        var = jnp.sum(h * h, axis=-1, keepdims=True) * inv_d - mu * mu
        return (h - mu) * jax.lax.rsqrt(var + LN_EPS) * g + b

    # ---- residual + post-LN 1 ----
    h = layer_norm(x + attn, ln1g_ref[...], ln1b_ref[...])

    # ---- feed-forward (ReLU) ----
    f = jnp.maximum(mm(h, w1_ref[...]) + b1_ref[...], 0.0)
    f = mm(f, w2_ref[...]) + b2_ref[...]

    # ---- residual + post-LN 2 ----
    h2 = layer_norm(h + f, ln2g_ref[...], ln2b_ref[...])

    # ---- output linear: lane-dense padded logits (sliced back in the wrapper) ----
    out = mm(h2, wl_ref[...]) + bl_ref[...]
    out_ref[...] = out.reshape(bt, slen, a_pad).astype(out_ref.dtype)


def _pad2d(w, rows, cols, dtype):
    out = jnp.zeros((rows, cols), dtype)
    return out.at[: w.shape[0], : w.shape[1]].set(w.astype(dtype))


def _pack_weights(params, d_pad, f_pad, a_pad, mm_dtype):
    f32 = jnp.float32
    wqkv = jnp.concatenate([_pad2d(params["wq"], d_pad, d_pad, mm_dtype),
                            _pad2d(params["wk"], d_pad, d_pad, mm_dtype),
                            _pad2d(params["wv"], d_pad, d_pad, mm_dtype)], axis=1)
    bqkv = jnp.concatenate([_pad2d(params["bq"], 1, d_pad, f32),
                            _pad2d(params["bk"], 1, d_pad, f32),
                            _pad2d(params["bv"], 1, d_pad, f32)], axis=1)
    return [
        wqkv, bqkv,
        _pad2d(params["wo"], d_pad, d_pad, mm_dtype), _pad2d(params["bo"], 1, d_pad, f32),
        _pad2d(params["ln1g"], 1, d_pad, f32), _pad2d(params["ln1b"], 1, d_pad, f32),
        _pad2d(params["w1"], d_pad, f_pad, mm_dtype), _pad2d(params["b1"], 1, f_pad, f32),
        _pad2d(params["w2"], f_pad, d_pad, mm_dtype), _pad2d(params["b2"], 1, d_pad, f32),
        _pad2d(params["ln2g"], 1, d_pad, f32), _pad2d(params["ln2b"], 1, d_pad, f32),
        _pad2d(params["wl"], d_pad, a_pad, mm_dtype), _pad2d(params["bl"], 1, a_pad, f32),
    ]


def transformer_forward(x_tokens, lengths, params, *, use_bf16_matmul=True, b_tile=None):
    """x_tokens: int32 (bs, slen); lengths: int32 (bs). Returns f32 (bs, slen, n_actions)."""
    emb_table = params["emb"]
    bs, slen = x_tokens.shape
    d_model = emb_table.shape[1]
    ffn_dim = params["w1"].shape[1]
    n_actions = params["wl"].shape[1]

    d_pad = _round_up(d_model, LANE)
    f_pad = _round_up(ffn_dim, LANE)
    a_pad = _round_up(n_actions, LANE)      # lane-dense output store / DMA
    mm_dtype = jnp.bfloat16 if use_bf16_matmul else jnp.float32

    # Glue: embedding gather + padding mask (applied here, not in the kernel).
    # TODO(synk): an in-kernel embedding gather would need a manual DMA gather.
    emb = jnp.take(emb_table, x_tokens, axis=0).astype(jnp.float32)          # (bs, S, D)
    mask = (jnp.arange(slen)[None, :] < lengths[:, None]).astype(jnp.float32)
    emb = emb * mask[..., None]
    emb = jnp.pad(emb, ((0, 0), (0, 0), (0, d_pad - d_model)))               # (bs, S, Dp)

    # Batch tiling: many sequences per grid step (target ~256 KiB activations/step).
    # Note for v7x (2 TensorCores): prefer b_tile <= bs // 2 so the "parallel"
    # grid has >= 2 steps; on v5e/v6e fewer, bigger steps are strictly better.
    if b_tile is None:
        b_tile = max(1, min(bs, (256 * 1024) // (slen * d_pad * 4)))
    bs_pad = _round_up(bs, b_tile)
    if bs_pad != bs:
        emb = jnp.pad(emb, ((0, bs_pad - bs), (0, 0), (0, 0)))

    weights = _pack_weights(params, d_pad, f_pad, a_pad, mm_dtype)
    # Weights use a constant index_map so Pallas keeps them VMEM-resident across
    # grid steps. At real (larger) controller sizes on v7x (64 MiB VMEM) they
    # could additionally be single-buffered via pipeline_mode=pl.Buffered(1).
    weight_specs = [pl.BlockSpec(w.shape, lambda b: (0, 0)) for w in weights]

    kernel = functools.partial(transformer_kernel, d_model=d_model, mm_dtype=mm_dtype)

    # Advisory cost estimate so XLA can overlap the gather/pad glue with the kernel.
    tokens = bs_pad * slen
    flops = (2 * tokens * d_pad * (3 * d_pad + d_pad + f_pad + f_pad + a_pad)
             + 4 * bs_pad * slen * slen * d_pad)
    transcendentals = bs_pad * slen * slen + 3 * tokens
    bytes_accessed = (_nbytes(emb) + 4 * bs_pad * slen * a_pad
                      + sum(_nbytes(w) for w in weights))

    out = pl.pallas_call(
        kernel,
        out_shape=jax.ShapeDtypeStruct((bs_pad, slen, a_pad), jnp.float32),
        grid_spec=pltpu.PrefetchScalarGridSpec(
            num_scalar_prefetch=0,
            grid=(bs_pad // b_tile,),
            in_specs=[pl.BlockSpec((b_tile, slen, d_pad), lambda b: (b, 0, 0))]
                     + weight_specs,
            out_specs=pl.BlockSpec((b_tile, slen, a_pad), lambda b: (b, 0, 0)),
        ),
        compiler_params=pltpu.CompilerParams(dimension_semantics=("parallel",)),
        cost_estimate=pl.CostEstimate(flops=int(flops),
                                      transcendentals=int(transcendentals),
                                      bytes_accessed=int(bytes_accessed)),
    )(emb, *weights)

    return out[:bs, :, :n_actions]


def init_params(key, n_actions, emb_dim, ffn_dim, pad_index):
    ks = jax.random.split(key, 16)
    d = emb_dim

    emb = jax.random.normal(ks[0], (n_actions, d), jnp.float32) * (d ** -0.5)
    emb = emb.at[pad_index].set(0.0)

    def lin(k, fan_in, fan_out):
        bound = 1.0 / np.sqrt(fan_in)
        return jax.random.uniform(k, (fan_in, fan_out), jnp.float32, -bound, bound)

    return {
        "emb": emb,
        "wq": lin(ks[1], d, d), "bq": jnp.zeros((1, d), jnp.float32),
        "wk": lin(ks[2], d, d), "bk": jnp.zeros((1, d), jnp.float32),
        "wv": lin(ks[3], d, d), "bv": jnp.zeros((1, d), jnp.float32),
        "wo": lin(ks[4], d, d), "bo": jnp.zeros((1, d), jnp.float32),
        "ln1g": jnp.ones((1, d), jnp.float32), "ln1b": jnp.zeros((1, d), jnp.float32),
        "w1": lin(ks[5], d, ffn_dim), "b1": jnp.zeros((1, ffn_dim), jnp.float32),
        "w2": lin(ks[6], ffn_dim, d), "b2": jnp.zeros((1, d), jnp.float32),
        "ln2g": jnp.ones((1, d), jnp.float32), "ln2b": jnp.zeros((1, d), jnp.float32),
        "wl": lin(ks[7], d, n_actions), "bl": jnp.zeros((1, n_actions), jnp.float32),
    }


def reference_forward(x_tokens, lengths, p):
    """Pure-JAX reference mirroring the torch forward semantics (unpadded, f32)."""
    hi = jax.lax.Precision.HIGHEST
    bs, slen = x_tokens.shape
    mask = (jnp.arange(slen)[None, :] < lengths[:, None]).astype(jnp.float32)[..., None]
    x = jnp.take(p["emb"], x_tokens, axis=0) * mask
    d = x.shape[-1]
    scale = 1.0 / np.sqrt(d)
    q = jnp.einsum("bsd,de->bse", x, p["wq"], precision=hi) + p["bq"]
    k = jnp.einsum("bsd,de->bse", x, p["wk"], precision=hi) + p["bk"]
    v = jnp.einsum("bsd,de->bse", x, p["wv"], precision=hi) + p["bv"]
    s = jnp.einsum("bqd,bkd->bqk", q, k, precision=hi) * scale
    a = jax.nn.softmax(s, axis=-1)
    attn = jnp.einsum("bqk,bkd->bqd", a, v, precision=hi)
    attn = jnp.einsum("bsd,de->bse", attn, p["wo"], precision=hi) + p["bo"]

    def ln(h, g, b):
        mu = jnp.mean(h, axis=-1, keepdims=True)
        var = jnp.mean((h - mu) ** 2, axis=-1, keepdims=True)
        return (h - mu) * jax.lax.rsqrt(var + LN_EPS) * g + b

    h = ln(x + attn, p["ln1g"], p["ln1b"])
    f = jnp.maximum(jnp.einsum("bsd,df->bsf", h, p["w1"], precision=hi) + p["b1"], 0.0)
    f = jnp.einsum("bsf,fd->bsd", f, p["w2"], precision=hi) + p["b2"]
    h2 = ln(h + f, p["ln2g"], p["ln2b"])
    return jnp.einsum("bsd,da->bsa", h2, p["wl"], precision=hi) + p["bl"]


if __name__ == "__main__":
    # Small config consistent with the controller: vocab = n_actions, pad_index = 0.
    bs, slen = 2, 8
    n_actions, emb_dim, ffn_dim, pad_index = 16, 32, 64, 0

    key = jax.random.PRNGKey(0)
    k_tok, k_param = jax.random.split(key)

    lengths = jnp.array([8, 5], dtype=jnp.int32)
    x_tokens = jax.random.randint(k_tok, (bs, slen), 1, n_actions, dtype=jnp.int32)
    # zero out (pad) tokens past each sequence length, as a real controller batch would
    pad_mask = jnp.arange(slen)[None, :] < lengths[:, None]
    x_tokens = jnp.where(pad_mask, x_tokens, pad_index).astype(jnp.int32)

    params = init_params(k_param, n_actions, emb_dim, ffn_dim, pad_index)

    ref = jax.block_until_ready(reference_forward(x_tokens, lengths, params))

    # f32 MXU path (v5e-friendly) — tight check against the f32 reference.
    out_f32 = jax.block_until_ready(
        transformer_forward(x_tokens, lengths, params, use_bf16_matmul=False))
    assert out_f32.shape == (bs, slen, n_actions)
    np.testing.assert_allclose(np.asarray(out_f32), np.asarray(ref), rtol=1e-2, atol=1e-2)

    # bf16-MXU path (v6e/v7x fast path) — looser tolerance for bf16 matmul rounding.
    out_bf16 = jax.block_until_ready(
        transformer_forward(x_tokens, lengths, params, use_bf16_matmul=True))
    assert out_bf16.shape == (bs, slen, n_actions)
    np.testing.assert_allclose(np.asarray(out_bf16), np.asarray(ref), rtol=3e-2, atol=3e-2)

    print("KERNEL_OK")
</pallas_src>

<mosaic_0001>
module attributes {stable_mosaic.version = 11 : i64} {
  func.func @transformer_kernel(%arg0: i32, %arg1: memref<2x8x128xf32, #tpu.memory_space<vmem>>, %arg2: memref<128x384xf32, #tpu.memory_space<vmem>>, %arg3: memref<1x384xf32, #tpu.memory_space<vmem>>, %arg4: memref<128x128xf32, #tpu.memory_space<vmem>>, %arg5: memref<1x128xf32, #tpu.memory_space<vmem>>, %arg6: memref<1x128xf32, #tpu.memory_space<vmem>>, %arg7: memref<1x128xf32, #tpu.memory_space<vmem>>, %arg8: memref<128x128xf32, #tpu.memory_space<vmem>>, %arg9: memref<1x128xf32, #tpu.memory_space<vmem>>, %arg10: memref<128x128xf32, #tpu.memory_space<vmem>>, %arg11: memref<1x128xf32, #tpu.memory_space<vmem>>, %arg12: memref<1x128xf32, #tpu.memory_space<vmem>>, %arg13: memref<1x128xf32, #tpu.memory_space<vmem>>, %arg14: memref<128x128xf32, #tpu.memory_space<vmem>>, %arg15: memref<1x128xf32, #tpu.memory_space<vmem>>, %arg16: memref<2x8x128xf32, #tpu.memory_space<vmem>>) attributes {dimension_semantics = [#tpu.dimension_semantics<parallel>], iteration_bounds = array<i64: 1>, scalar_prefetch = 0 : i64, scratch_operands = 0 : i64, tpu.core_type = #tpu.core_type<tc>, window_params = [{transform_indices = @transform_0, window_bounds = array<i64: 2, 8, 128>}, {pipeline_mode = #tpu.pipeline_mode<synchronous>, transform_indices = @transform_1, window_bounds = array<i64: 128, 384>}, {pipeline_mode = #tpu.pipeline_mode<synchronous>, transform_indices = @transform_2, window_bounds = array<i64: 1, 384>}, {pipeline_mode = #tpu.pipeline_mode<synchronous>, transform_indices = @transform_3, window_bounds = array<i64: 128, 128>}, {pipeline_mode = #tpu.pipeline_mode<synchronous>, transform_indices = @transform_4, window_bounds = array<i64: 1, 128>}, {pipeline_mode = #tpu.pipeline_mode<synchronous>, transform_indices = @transform_5, window_bounds = array<i64: 1, 128>}, {pipeline_mode = #tpu.pipeline_mode<synchronous>, transform_indices = @transform_6, window_bounds = array<i64: 1, 128>}, {pipeline_mode = #tpu.pipeline_mode<synchronous>, transform_indices = @transform_7, window_bounds = array<i64: 128, 128>}, {pipeline_mode = #tpu.pipeline_mode<synchronous>, transform_indices = @transform_8, window_bounds = array<i64: 1, 128>}, {pipeline_mode = #tpu.pipeline_mode<synchronous>, transform_indices = @transform_9, window_bounds = array<i64: 128, 128>}, {pipeline_mode = #tpu.pipeline_mode<synchronous>, transform_indices = @transform_10, window_bounds = array<i64: 1, 128>}, {pipeline_mode = #tpu.pipeline_mode<synchronous>, transform_indices = @transform_11, window_bounds = array<i64: 1, 128>}, {pipeline_mode = #tpu.pipeline_mode<synchronous>, transform_indices = @transform_12, window_bounds = array<i64: 1, 128>}, {pipeline_mode = #tpu.pipeline_mode<synchronous>, transform_indices = @transform_13, window_bounds = array<i64: 128, 128>}, {pipeline_mode = #tpu.pipeline_mode<synchronous>, transform_indices = @transform_14, window_bounds = array<i64: 1, 128>}, {transform_indices = @transform_15, window_bounds = array<i64: 2, 8, 128>}]} {
    %c0 = arith.constant 0 : index
    %c0_0 = arith.constant 0 : index
    %c0_1 = arith.constant 0 : index
    %0 = vector.load %arg1[%c0, %c0_0, %c0_1] : memref<2x8x128xf32, #tpu.memory_space<vmem>>, vector<2x8x128xf32>
    %1 = vector.shape_cast %0 : vector<2x8x128xf32> to vector<16x128xf32>
    %c0_2 = arith.constant 0 : index
    %c0_3 = arith.constant 0 : index
    %2 = vector.load %arg2[%c0_2, %c0_3] : memref<128x384xf32, #tpu.memory_space<vmem>>, vector<128x384xf32>
    %cst = arith.constant dense<0.000000e+00> : vector<16x384xf32>
    %3 = tpu.matmul %1, %2, %cst {dimension_numbers = #tpu.dot_dimension_numbers<[1], [0], [0], [1], [0, 0, 1, 1], [], []>} : vector<16x128xf32>, vector<128x384xf32>, vector<16x384xf32> -> vector<16x384xf32>
    %c0_4 = arith.constant 0 : index
    %c0_5 = arith.constant 0 : index
    %4 = vector.load %arg3[%c0_4, %c0_5] : memref<1x384xf32, #tpu.memory_space<vmem>>, vector<1x384xf32>
    %5 = vector.broadcast %4 : vector<1x384xf32> to vector<16x384xf32>
    %6 = arith.addf %3, %5 : vector<16x384xf32>
    %7 = vector.extract_strided_slice %6 {offsets = [0, 0], sizes = [16, 128], strides = [1, 1]} : vector<16x384xf32> to vector<16x128xf32>
    %cst_6 = arith.constant 0.176776692 : f32
    %8 = vector.broadcast %cst_6 : f32 to vector<16x128xf32>
    %9 = arith.mulf %7, %8 : vector<16x128xf32>
    %10 = vector.extract_strided_slice %6 {offsets = [0, 128], sizes = [16, 128], strides = [1, 1]} : vector<16x384xf32> to vector<16x128xf32>
    %11 = vector.extract_strided_slice %6 {offsets = [0, 256], sizes = [16, 128], strides = [1, 1]} : vector<16x384xf32> to vector<16x128xf32>
    %12 = vector.shape_cast %9 : vector<16x128xf32> to vector<2x8x128xf32>
    %13 = vector.shape_cast %10 : vector<16x128xf32> to vector<2x8x128xf32>
    %14 = vector.shape_cast %11 : vector<16x128xf32> to vector<2x8x128xf32>
    "tpu.trace_start"() <{level = 10 : i32, message = "bqd,bkd->bqk"}> : () -> ()
    %cst_7 = arith.constant dense<0.000000e+00> : vector<2x8x8xf32>
    %15 = tpu.matmul %12, %13, %cst_7 {dimension_numbers = #tpu.dot_dimension_numbers<[2], [2], [1], [1], [0, 0, 0, 1, 1, 1], [0], [0]>} : vector<2x8x128xf32>, vector<2x8x128xf32>, vector<2x8x8xf32> -> vector<2x8x8xf32>
    "tpu.trace_stop"() : () -> ()
    %cst_8 = arith.constant dense<0xFF800000> : vector<2x8xf32>
    %16 = vector.multi_reduction <maximumf>, %15, %cst_8 [2] : vector<2x8x8xf32> to vector<2x8xf32>
    %17 = vector.shape_cast %16 : vector<2x8xf32> to vector<2x8x1xf32>
    %18 = vector.broadcast %17 : vector<2x8x1xf32> to vector<2x8x8xf32>
    %19 = arith.subf %15, %18 : vector<2x8x8xf32>
    %20 = math.exp %19 : vector<2x8x8xf32>
    %cst_9 = arith.constant dense<0.000000e+00> : vector<2x8xf32>
    %21 = vector.multi_reduction <add>, %20, %cst_9 [2] : vector<2x8x8xf32> to vector<2x8xf32>
    %22 = vector.shape_cast %21 : vector<2x8xf32> to vector<2x8x1xf32>
    %23 = tpu.reciprocal %22 {approx = true} : vector<2x8x1xf32> -> vector<2x8x1xf32>
    %24 = vector.broadcast %23 : vector<2x8x1xf32> to vector<2x8x8xf32>
    %25 = arith.mulf %20, %24 : vector<2x8x8xf32>
    "tpu.trace_start"() <{level = 10 : i32, message = "bqk,bkd->bqd"}> : () -> ()
    %cst_10 = arith.constant dense<0.000000e+00> : vector<2x8x128xf32>
    %26 = tpu.matmul %25, %14, %cst_10 {dimension_numbers = #tpu.dot_dimension_numbers<[2], [1], [1], [2], [0, 0, 0, 1, 1, 2], [0], [0]>} : vector<2x8x8xf32>, vector<2x8x128xf32>, vector<2x8x128xf32> -> vector<2x8x128xf32>
    "tpu.trace_stop"() : () -> ()
    %27 = vector.shape_cast %26 : vector<2x8x128xf32> to vector<16x128xf32>
    %c0_11 = arith.constant 0 : index
    %c0_12 = arith.constant 0 : index
    %28 = vector.load %arg4[%c0_11, %c0_12] : memref<128x128xf32, #tpu.memory_space<vmem>>, vector<128x128xf32>
    %cst_13 = arith.constant dense<0.000000e+00> : vector<16x128xf32>
    %29 = tpu.matmul %27, %28, %cst_13 {dimension_numbers = #tpu.dot_dimension_numbers<[1], [0], [0], [1], [0, 0, 1, 1], [], []>} : vector<16x128xf32>, vector<128x128xf32>, vector<16x128xf32> -> vector<16x128xf32>
    %c0_14 = arith.constant 0 : index
    %c0_15 = arith.constant 0 : index
    %30 = vector.load %arg5[%c0_14, %c0_15] : memref<1x128xf32, #tpu.memory_space<vmem>>, vector<1x128xf32>
    %31 = vector.broadcast %30 : vector<1x128xf32> to vector<16x128xf32>
    %32 = arith.addf %29, %31 : vector<16x128xf32>
    %33 = arith.addf %1, %32 : vector<16x128xf32>
    %c0_16 = arith.constant 0 : index
    %c0_17 = arith.constant 0 : index
    %34 = vector.load %arg6[%c0_16, %c0_17] : memref<1x128xf32, #tpu.memory_space<vmem>>, vector<1x128xf32>
    %c0_18 = arith.constant 0 : index
    %c0_19 = arith.constant 0 : index
    %35 = vector.load %arg7[%c0_18, %c0_19] : memref<1x128xf32, #tpu.memory_space<vmem>>, vector<1x128xf32>
    %cst_20 = arith.constant dense<0.000000e+00> : vector<16xf32>
    %36 = vector.multi_reduction <add>, %33, %cst_20 [1] : vector<16x128xf32> to vector<16xf32>
    %37 = vector.shape_cast %36 : vector<16xf32> to vector<16x1xf32>
    %cst_21 = arith.constant 3.125000e-02 : f32
    %38 = vector.broadcast %cst_21 : f32 to vector<16x1xf32>
    %39 = arith.mulf %37, %38 : vector<16x1xf32>
    %40 = arith.mulf %33, %33 : vector<16x128xf32>
    %cst_22 = arith.constant dense<0.000000e+00> : vector<16xf32>
    %41 = vector.multi_reduction <add>, %40, %cst_22 [1] : vector<16x128xf32> to vector<16xf32>
    %42 = vector.shape_cast %41 : vector<16xf32> to vector<16x1xf32>
    %cst_23 = arith.constant 3.125000e-02 : f32
    %43 = vector.broadcast %cst_23 : f32 to vector<16x1xf32>
    %44 = arith.mulf %42, %43 : vector<16x1xf32>
    %45 = arith.mulf %39, %39 : vector<16x1xf32>
    %46 = arith.subf %44, %45 : vector<16x1xf32>
    %47 = vector.broadcast %39 : vector<16x1xf32> to vector<16x128xf32>
    %48 = arith.subf %33, %47 : vector<16x128xf32>
    %cst_24 = arith.constant 9.99999974E-6 : f32
    %49 = vector.broadcast %cst_24 : f32 to vector<16x1xf32>
    %50 = arith.addf %46, %49 : vector<16x1xf32>
    %51 = math.rsqrt %50 : vector<16x1xf32>
    %52 = vector.broadcast %51 : vector<16x1xf32> to vector<16x128xf32>
    %53 = arith.mulf %48, %52 : vector<16x128xf32>
    %54 = vector.broadcast %34 : vector<1x128xf32> to vector<16x128xf32>
    %55 = arith.mulf %53, %54 : vector<16x128xf32>
    %56 = vector.broadcast %35 : vector<1x128xf32> to vector<16x128xf32>
    %57 = arith.addf %55, %56 : vector<16x128xf32>
    %c0_25 = arith.constant 0 : index
    %c0_26 = arith.constant 0 : index
    %58 = vector.load %arg8[%c0_25, %c0_26] : memref<128x128xf32, #tpu.memory_space<vmem>>, vector<128x128xf32>
    %cst_27 = arith.constant dense<0.000000e+00> : vector<16x128xf32>
    %59 = tpu.matmul %57, %58, %cst_27 {dimension_numbers = #tpu.dot_dimension_numbers<[1], [0], [0], [1], [0, 0, 1, 1], [], []>} : vector<16x128xf32>, vector<128x128xf32>, vector<16x128xf32> -> vector<16x128xf32>
    %c0_28 = arith.constant 0 : index
    %c0_29 = arith.constant 0 : index
    %60 = vector.load %arg9[%c0_28, %c0_29] : memref<1x128xf32, #tpu.memory_space<vmem>>, vector<1x128xf32>
    %61 = vector.broadcast %60 : vector<1x128xf32> to vector<16x128xf32>
    %62 = arith.addf %59, %61 : vector<16x128xf32>
    %cst_30 = arith.constant 0.000000e+00 : f32
    %63 = vector.broadcast %cst_30 : f32 to vector<16x128xf32>
    %64 = arith.maximumf %62, %63 : vector<16x128xf32>
    %c0_31 = arith.constant 0 : index
    %c0_32 = arith.constant 0 : index
    %65 = vector.load %arg10[%c0_31, %c0_32] : memref<128x128xf32, #tpu.memory_space<vmem>>, vector<128x128xf32>
    %cst_33 = arith.constant dense<0.000000e+00> : vector<16x128xf32>
    %66 = tpu.matmul %64, %65, %cst_33 {dimension_numbers = #tpu.dot_dimension_numbers<[1], [0], [0], [1], [0, 0, 1, 1], [], []>} : vector<16x128xf32>, vector<128x128xf32>, vector<16x128xf32> -> vector<16x128xf32>
    %c0_34 = arith.constant 0 : index
    %c0_35 = arith.constant 0 : index
    %67 = vector.load %arg11[%c0_34, %c0_35] : memref<1x128xf32, #tpu.memory_space<vmem>>, vector<1x128xf32>
    %68 = vector.broadcast %67 : vector<1x128xf32> to vector<16x128xf32>
    %69 = arith.addf %66, %68 : vector<16x128xf32>
    %70 = arith.addf %57, %69 : vector<16x128xf32>
    %c0_36 = arith.constant 0 : index
    %c0_37 = arith.constant 0 : index
    %71 = vector.load %arg12[%c0_36, %c0_37] : memref<1x128xf32, #tpu.memory_space<vmem>>, vector<1x128xf32>
    %c0_38 = arith.constant 0 : index
    %c0_39 = arith.constant 0 : index
    %72 = vector.load %arg13[%c0_38, %c0_39] : memref<1x128xf32, #tpu.memory_space<vmem>>, vector<1x128xf32>
    %cst_40 = arith.constant dense<0.000000e+00> : vector<16xf32>
    %73 = vector.multi_reduction <add>, %70, %cst_40 [1] : vector<16x128xf32> to vector<16xf32>
    %74 = vector.shape_cast %73 : vector<16xf32> to vector<16x1xf32>
    %cst_41 = arith.constant 3.125000e-02 : f32
    %75 = vector.broadcast %cst_41 : f32 to vector<16x1xf32>
    %76 = arith.mulf %74, %75 : vector<16x1xf32>
    %77 = arith.mulf %70, %70 : vector<16x128xf32>
    %cst_42 = arith.constant dense<0.000000e+00> : vector<16xf32>
    %78 = vector.multi_reduction <add>, %77, %cst_42 [1] : vector<16x128xf32> to vector<16xf32>
    %79 = vector.shape_cast %78 : vector<16xf32> to vector<16x1xf32>
    %cst_43 = arith.constant 3.125000e-02 : f32
    %80 = vector.broadcast %cst_43 : f32 to vector<16x1xf32>
    %81 = arith.mulf %79, %80 : vector<16x1xf32>
    %82 = arith.mulf %76, %76 : vector<16x1xf32>
    %83 = arith.subf %81, %82 : vector<16x1xf32>
    %84 = vector.broadcast %76 : vector<16x1xf32> to vector<16x128xf32>
    %85 = arith.subf %70, %84 : vector<16x128xf32>
    %cst_44 = arith.constant 9.99999974E-6 : f32
    %86 = vector.broadcast %cst_44 : f32 to vector<16x1xf32>
    %87 = arith.addf %83, %86 : vector<16x1xf32>
    %88 = math.rsqrt %87 : vector<16x1xf32>
    %89 = vector.broadcast %88 : vector<16x1xf32> to vector<16x128xf32>
    %90 = arith.mulf %85, %89 : vector<16x128xf32>
    %91 = vector.broadcast %71 : vector<1x128xf32> to vector<16x128xf32>
    %92 = arith.mulf %90, %91 : vector<16x128xf32>
    %93 = vector.broadcast %72 : vector<1x128xf32> to vector<16x128xf32>
    %94 = arith.addf %92, %93 : vector<16x128xf32>
    %c0_45 = arith.constant 0 : index
    %c0_46 = arith.constant 0 : index
    %95 = vector.load %arg14[%c0_45, %c0_46] : memref<128x128xf32, #tpu.memory_space<vmem>>, vector<128x128xf32>
    %cst_47 = arith.constant dense<0.000000e+00> : vector<16x128xf32>
    %96 = tpu.matmul %94, %95, %cst_47 {dimension_numbers = #tpu.dot_dimension_numbers<[1], [0], [0], [1], [0, 0, 1, 1], [], []>} : vector<16x128xf32>, vector<128x128xf32>, vector<16x128xf32> -> vector<16x128xf32>
    %c0_48 = arith.constant 0 : index
    %c0_49 = arith.constant 0 : index
    %97 = vector.load %arg15[%c0_48, %c0_49] : memref<1x128xf32, #tpu.memory_space<vmem>>, vector<1x128xf32>
    %98 = vector.broadcast %97 : vector<1x128xf32> to vector<16x128xf32>
    %99 = arith.addf %96, %98 : vector<16x128xf32>
    %100 = vector.shape_cast %99 : vector<16x128xf32> to vector<2x8x128xf32>
    %c0_50 = arith.constant 0 : index
    %c0_51 = arith.constant 0 : index
    %c0_52 = arith.constant 0 : index
    %101 = vector.load %arg16[%c0_50, %c0_51, %c0_52] : memref<2x8x128xf32, #tpu.memory_space<vmem>>, vector<2x8x128xf32>
    tpu.vector_store %arg16[%c0_50, %c0_51, %c0_52], %100 {strides = array<i32>} : memref<2x8x128xf32, #tpu.memory_space<vmem>>, vector<2x8x128xf32>,
    return
  }
  func.func @transform_0(%arg0: i32) -> (i32, i32, i32) {
    %c0_i32 = arith.constant 0 : i32
    %c0_i32_0 = arith.constant 0 : i32
    %c0_i32_1 = arith.constant 0 : i32
    return %arg0, %c0_i32, %c0_i32_0 : i32, i32, i32
  }
  func.func @transform_1(%arg0: i32) -> (i32, i32) {
    %c0_i32 = arith.constant 0 : i32
    %c0_i32_0 = arith.constant 0 : i32
    %c0_i32_1 = arith.constant 0 : i32
    return %c0_i32, %c0_i32_0 : i32, i32
  }
  func.func @transform_2(%arg0: i32) -> (i32, i32) {
    %c0_i32 = arith.constant 0 : i32
    %c0_i32_0 = arith.constant 0 : i32
    %c0_i32_1 = arith.constant 0 : i32
    return %c0_i32, %c0_i32_0 : i32, i32
  }
  func.func @transform_3(%arg0: i32) -> (i32, i32) {
    %c0_i32 = arith.constant 0 : i32
    %c0_i32_0 = arith.constant 0 : i32
    %c0_i32_1 = arith.constant 0 : i32
    return %c0_i32, %c0_i32_0 : i32, i32
  }
  func.func @transform_4(%arg0: i32) -> (i32, i32) {
    %c0_i32 = arith.constant 0 : i32
    %c0_i32_0 = arith.constant 0 : i32
    %c0_i32_1 = arith.constant 0 : i32
    return %c0_i32, %c0_i32_0 : i32, i32
  }
  func.func @transform_5(%arg0: i32) -> (i32, i32) {
    %c0_i32 = arith.constant 0 : i32
    %c0_i32_0 = arith.constant 0 : i32
    %c0_i32_1 = arith.constant 0 : i32
    return %c0_i32, %c0_i32_0 : i32, i32
  }
  func.func @transform_6(%arg0: i32) -> (i32, i32) {
    %c0_i32 = arith.constant 0 : i32
    %c0_i32_0 = arith.constant 0 : i32
    %c0_i32_1 = arith.constant 0 : i32
    return %c0_i32, %c0_i32_0 : i32, i32
  }
  func.func @transform_7(%arg0: i32) -> (i32, i32) {
    %c0_i32 = arith.constant 0 : i32
    %c0_i32_0 = arith.constant 0 : i32
    %c0_i32_1 = arith.constant 0 : i32
    return %c0_i32, %c0_i32_0 : i32, i32
  }
  func.func @transform_8(%arg0: i32) -> (i32, i32) {
    %c0_i32 = arith.constant 0 : i32
    %c0_i32_0 = arith.constant 0 : i32
    %c0_i32_1 = arith.constant 0 : i32
    return %c0_i32, %c0_i32_0 : i32, i32
  }
  func.func @transform_9(%arg0: i32) -> (i32, i32) {
    %c0_i32 = arith.constant 0 : i32
    %c0_i32_0 = arith.constant 0 : i32
    %c0_i32_1 = arith.constant 0 : i32
    return %c0_i32, %c0_i32_0 : i32, i32
  }
  func.func @transform_10(%arg0: i32) -> (i32, i32) {
    %c0_i32 = arith.constant 0 : i32
    %c0_i32_0 = arith.constant 0 : i32
    %c0_i32_1 = arith.constant 0 : i32
    return %c0_i32, %c0_i32_0 : i32, i32
  }
  func.func @transform_11(%arg0: i32) -> (i32, i32) {
    %c0_i32 = arith.constant 0 : i32
    %c0_i32_0 = arith.constant 0 : i32
    %c0_i32_1 = arith.constant 0 : i32
    return %c0_i32, %c0_i32_0 : i32, i32
  }
  func.func @transform_12(%arg0: i32) -> (i32, i32) {
    %c0_i32 = arith.constant 0 : i32
    %c0_i32_0 = arith.constant 0 : i32
    %c0_i32_1 = arith.constant 0 : i32
    return %c0_i32, %c0_i32_0 : i32, i32
  }
  func.func @transform_13(%arg0: i32) -> (i32, i32) {
    %c0_i32 = arith.constant 0 : i32
    %c0_i32_0 = arith.constant 0 : i32
    %c0_i32_1 = arith.constant 0 : i32
    return %c0_i32, %c0_i32_0 : i32, i32
  }
  func.func @transform_14(%arg0: i32) -> (i32, i32) {
    %c0_i32 = arith.constant 0 : i32
    %c0_i32_0 = arith.constant 0 : i32
    %c0_i32_1 = arith.constant 0 : i32
    return %c0_i32, %c0_i32_0 : i32, i32
  }
  func.func @transform_15(%arg0: i32) -> (i32, i32, i32) {
    %c0_i32 = arith.constant 0 : i32
    %c0_i32_0 = arith.constant 0 : i32
    %c0_i32_1 = arith.constant 0 : i32
    return %arg0, %c0_i32, %c0_i32_0 : i32, i32, i32
  }
}

</mosaic_0001>

<llo_original>
// kernel: tpu_custom_call.1
$region0: #{tpu_custom_call.1}
  #allocation0 [shape = 'u32[]', space=smem, size = 0x4, offset = 0x4, fixed_abs, tag = 'smem constant byte address 0x4 - core index']
  #allocation1 [shape = 'u32[72,128]{1,0:T(1,128)}', space=vmem, size = 0x9000, scoped, tag = 'internal scratch']
  %s0 = inlined_call_operand.hbm [shape: f32[2,8,128], index: 0, kind: input, shape index: {}]
  %s1 = inlined_call_operand.hbm [shape: f32[128,384], index: 1, kind: input, shape index: {}]
  %s2 = inlined_call_operand.hbm [shape: f32[1,384], index: 2, kind: input, shape index: {}]
  %s3 = inlined_call_operand.hbm [shape: f32[128,128], index: 3, kind: input, shape index: {}]
  %s4 = inlined_call_operand.vmem [shape: f32[1,128], index: 4, kind: input, shape index: {}]
  %s5 = inlined_call_operand.vmem [shape: f32[1,128], index: 5, kind: input, shape index: {}]
  %s6 = inlined_call_operand.vmem [shape: f32[1,128], index: 6, kind: input, shape index: {}]
  %s7 = inlined_call_operand.hbm [shape: f32[128,128], index: 7, kind: input, shape index: {}]
  %s8 = inlined_call_operand.vmem [shape: f32[1,128], index: 8, kind: input, shape index: {}]
  %s9 = inlined_call_operand.hbm [shape: f32[128,128], index: 9, kind: input, shape index: {}]
  %s10 = inlined_call_operand.vmem [shape: f32[1,128], index: 10, kind: input, shape index: {}]
  %s11 = inlined_call_operand.vmem [shape: f32[1,128], index: 11, kind: input, shape index: {}]
  %s12 = inlined_call_operand.vmem [shape: f32[1,128], index: 12, kind: input, shape index: {}]
  %s13 = inlined_call_operand.hbm [shape: f32[128,128], index: 13, kind: input, shape index: {}]
  %s14 = inlined_call_operand.vmem [shape: f32[1,128], index: 14, kind: input, shape index: {}]
  %s15 = inlined_call_operand.hbm [shape: f32[2,8,128], index: 15, kind: output, shape index: {}]
  %s16 = sld [smem:[#allocation0]]
  $region98: #{tpu_custom_call.1} parent=0
    _
  %s18 = ssub.s32 1, %s16
  %s19 = scalar_select 0, %s18, %s16
  $region1: #{tpu_custom_call.1} parent=0
    #allocation2 [shape = 'u8[8192]{0}', space=vmem, size = 0x2000, scoped, tag = 'input window, operand 0, single buffered']
    #allocation3 [shape = 's32[1]{0}', space=sflag, size = 0x4, scoped, tag = 'scoped memory for tpu_custom_call.1']
    #allocation4 [shape = 's32[1]{0}', space=sflag, size = 0x4, scoped, tag = 'scoped memory for tpu_custom_call.1']
    #allocation5 [shape = 'u8[196608]{0}', space=vmem, size = 0x30000, scoped, tag = 'input window, operand 1, single buffered']
    #allocation6 [shape = 's32[1]{0}', space=sflag, size = 0x4, scoped, tag = 'scoped memory for tpu_custom_call.1']
    #allocation7 [shape = 'u8[1536]{0}', space=vmem, size = 0x800, scoped, tag = 'input window, operand 2, single buffered']
    #allocation8 [shape = 'u8[65536]{0}', space=vmem, size = 0x10000, scoped, tag = 'input window, operand 3, single buffered']
    #allocation9 [shape = 's32[1]{0}', space=sflag, size = 0x4, scoped, tag = 'scoped memory for tpu_custom_call.1']
    #allocation10 [shape = 'u8[65536]{0}', space=vmem, size = 0x10000, scoped, tag = 'input window, operand 7, single buffered']
    #allocation11 [shape = 'u8[65536]{0}', space=vmem, size = 0x10000, scoped, tag = 'input window, operand 9, single buffered']
    #allocation12 [shape = 's32[1]{0}', space=sflag, size = 0x4, scoped, tag = 'scoped memory for tpu_custom_call.1']
    #allocation13 [shape = 'u8[65536]{0}', space=vmem, size = 0x10000, scoped, tag = 'input window, operand 13, single buffered']
    #allocation14 [shape = 'u8[8192]{0}', space=vmem, size = 0x2000, scoped, tag = 'output window, operand 0, single buffered']
    %20 = vsyncpa [#allocation3], 0
    %21 = vsyncpa [#allocation6], 0
    %22 = vsyncpa [#allocation9], 0
    %23 = vsyncpa [#allocation12], 0
    %24 = vsyncpa [#allocation4], 0
    // Predicated region
    $region2: #{tpu_custom_call.1} parent=1 // pred_check
      _
    $region3: #{tpu_custom_call.1} parent=1 // pred_check_branch
      %26 = sbr.rel (0) target = $region5
    $region4: #{tpu_custom_call.1} parent=1 // pred_region
      %28 = vsyncadd [#allocation3], 0
      %s29 = sshll.u32 %s0, 4
      %s30 = int_to_ptr.hbm [resolvable:$true] %s29
      %s31 = sshll.u32 [#allocation2], 4
      %s32 = int_to_ptr.vmem [resolvable:$true] %s31
      %37 = dma.hbm_to_vmem [thread:$0]  %s30, 256, %s32, [#allocation3], 128, 128, 8
    $region5: #{tpu_custom_call.1} parent=1 // pred_fallthru
      _
    // Predicated region
    $region6: #{tpu_custom_call.1} parent=1 // pred_check
      _
    $region7: #{tpu_custom_call.1} parent=1 // pred_check_branch
      %39 = sbr.rel (0) target = $region9
    $region8: #{tpu_custom_call.1} parent=1 // pred_region
      %41 = vsyncadd [#allocation6], 0
      %s42 = sshll.u32 %s1, 4
      %s43 = int_to_ptr.hbm [resolvable:$true] %s42
      %s44 = sshll.u32 [#allocation5], 4
      %s45 = int_to_ptr.vmem [resolvable:$true] %s44
      %50 = dma.hbm_to_vmem [thread:$0]  %s43, 6144, %s45, [#allocation6], 384, 384, 24
    $region9: #{tpu_custom_call.1} parent=1 // pred_fallthru
      _
    // Predicated region
    $region10: #{tpu_custom_call.1} parent=1 // pred_check
      _
    $region11: #{tpu_custom_call.1} parent=1 // pred_check_branch
      %52 = sbr.rel (0) target = $region13
    $region12: #{tpu_custom_call.1} parent=1 // pred_region
      %54 = vsyncadd [#allocation6], 0
      %s56 = sshll.u32 %s2, 4
      %s57 = int_to_ptr.hbm [resolvable:$true] %s56
      %s58 = sshll.u32 [#allocation7], 4
      %s59 = int_to_ptr.vmem [resolvable:$true] %s58
      %61 = dma.hbm_to_vmem [thread:$0]  %s57, 48, %s59, [#allocation6]
    $region13: #{tpu_custom_call.1} parent=1 // pred_fallthru
      _
    // Predicated region
    $region14: #{tpu_custom_call.1} parent=1 // pred_check
      _
    $region15: #{tpu_custom_call.1} parent=1 // pred_check_branch
      %63 = sbr.rel (0) target = $region17
    $region16: #{tpu_custom_call.1} parent=1 // pred_region
      %65 = vsyncadd [#allocation9], 0
      %s66 = sshll.u32 %s3, 4
      %s67 = int_to_ptr.hbm [resolvable:$true] %s66
      %s68 = sshll.u32 [#allocation8], 4
      %s69 = int_to_ptr.vmem [resolvable:$true] %s68
      %74 = dma.hbm_to_vmem [thread:$0]  %s67, 2048, %s69, [#allocation9], 128, 128, 8
    $region17: #{tpu_custom_call.1} parent=1 // pred_fallthru
      _
    // Predicated region
    $region18: #{tpu_custom_call.1} parent=1 // pred_check
      _
    $region19: #{tpu_custom_call.1} parent=1 // pred_check_branch
      %76 = sbr.rel (0) target = $region21
    $region20: #{tpu_custom_call.1} parent=1 // pred_region
      _
    $region21: #{tpu_custom_call.1} parent=1 // pred_fallthru
      _
    // Predicated region
    $region22: #{tpu_custom_call.1} parent=1 // pred_check
      _
    $region23: #{tpu_custom_call.1} parent=1 // pred_check_branch
      %78 = sbr.rel (0) target = $region25
    $region24: #{tpu_custom_call.1} parent=1 // pred_region
      _
    $region25: #{tpu_custom_call.1} parent=1 // pred_fallthru
      _
    // Predicated region
    $region26: #{tpu_custom_call.1} parent=1 // pred_check
      _
    $region27: #{tpu_custom_call.1} parent=1 // pred_check_branch
      %80 = sbr.rel (0) target = $region29
    $region28: #{tpu_custom_call.1} parent=1 // pred_region
      _
    $region29: #{tpu_custom_call.1} parent=1 // pred_fallthru
      _
    // Predicated region
    $region30: #{tpu_custom_call.1} parent=1 // pred_check
      _
    $region31: #{tpu_custom_call.1} parent=1 // pred_check_branch
      %82 = sbr.rel (0) target = $region33
    $region32: #{tpu_custom_call.1} parent=1 // pred_region
      %84 = vsyncadd [#allocation9], 0
      %s85 = sshll.u32 %s7, 4
      %s86 = int_to_ptr.hbm [resolvable:$true] %s85
      %s87 = sshll.u32 [#allocation10], 4
      %s88 = int_to_ptr.vmem [resolvable:$true] %s87
      %93 = dma.hbm_to_vmem [thread:$0]  %s86, 2048, %s88, [#allocation9], 128, 128, 8
    $region33: #{tpu_custom_call.1} parent=1 // pred_fallthru
      _
    // Predicated region
    $region34: #{tpu_custom_call.1} parent=1 // pred_check
      _
    $region35: #{tpu_custom_call.1} parent=1 // pred_check_branch
      %95 = sbr.rel (0) target = $region37
    $region36: #{tpu_custom_call.1} parent=1 // pred_region
      _
    $region37: #{tpu_custom_call.1} parent=1 // pred_fallthru
      _
    // Predicated region
    $region38: #{tpu_custom_call.1} parent=1 // pred_check
      _
    $region39: #{tpu_custom_call.1} parent=1 // pred_check_branch
      %97 = sbr.rel (0) target = $region41
    $region40: #{tpu_custom_call.1} parent=1 // pred_region
      %99 = vsyncadd [#allocation12], 0
      %s100 = sshll.u32 %s9, 4
      %s101 = int_to_ptr.hbm [resolvable:$true] %s100
      %s102 = sshll.u32 [#allocation11], 4
      %s103 = int_to_ptr.vmem [resolvable:$true] %s102
      %108 = dma.hbm_to_vmem [thread:$0]  %s101, 2048, %s103, [#allocation12], 128, 128, 8
    $region41: #{tpu_custom_call.1} parent=1 // pred_fallthru
      _
    // Predicated region
    $region42: #{tpu_custom_call.1} parent=1 // pred_check
      _
    $region43: #{tpu_custom_call.1} parent=1 // pred_check_branch
      %110 = sbr.rel (0) target = $region45
    $region44: #{tpu_custom_call.1} parent=1 // pred_region
      _
    $region45: #{tpu_custom_call.1} parent=1 // pred_fallthru
      _
    // Predicated region
    $region46: #{tpu_custom_call.1} parent=1 // pred_check
      _
    $region47: #{tpu_custom_call.1} parent=1 // pred_check_branch
      %112 = sbr.rel (0) target = $region49
    $region48: #{tpu_custom_call.1} parent=1 // pred_region
      _
    $region49: #{tpu_custom_call.1} parent=1 // pred_fallthru
      _
    // Predicated region
    $region50: #{tpu_custom_call.1} parent=1 // pred_check
      _
    $region51: #{tpu_custom_call.1} parent=1 // pred_check_branch
      %114 = sbr.rel (0) target = $region53
    $region52: #{tpu_custom_call.1} parent=1 // pred_region
      _
    $region53: #{tpu_custom_call.1} parent=1 // pred_fallthru
      _
    // Predicated region
    $region54: #{tpu_custom_call.1} parent=1 // pred_check
      _
    $region55: #{tpu_custom_call.1} parent=1 // pred_check_branch
      %116 = sbr.rel (0) target = $region57
    $region56: #{tpu_custom_call.1} parent=1 // pred_region
      %118 = vsyncadd [#allocation12], 0
      %s119 = sshll.u32 %s13, 4
      %s120 = int_to_ptr.hbm [resolvable:$true] %s119
      %s121 = sshll.u32 [#allocation13], 4
      %s122 = int_to_ptr.vmem [resolvable:$true] %s121
      %127 = dma.hbm_to_vmem [thread:$0]  %s120, 2048, %s122, [#allocation12], 128, 128, 8
    $region57: #{tpu_custom_call.1} parent=1 // pred_fallthru
      _
    // Predicated region
    $region58: #{tpu_custom_call.1} parent=1 // pred_check
      _
    $region59: #{tpu_custom_call.1} parent=1 // pred_check_branch
      %129 = sbr.rel (0) target = $region61
    $region60: #{tpu_custom_call.1} parent=1 // pred_region
      _
    $region61: #{tpu_custom_call.1} parent=1 // pred_fallthru
      _
    // Predicated region
    $region62: #{tpu_custom_call.1} parent=1 // pred_check
      _
    $region63: #{tpu_custom_call.1} parent=1 // pred_check_branch
      %131 = sbr.rel (0) target = $region65
    $region64: #{tpu_custom_call.1} parent=1 // pred_region
      %133 = dma.done [#allocation3], 256
    $region65: #{tpu_custom_call.1} parent=1 // pred_fallthru
      _
    // Predicated region
    $region66: #{tpu_custom_call.1} parent=1 // pred_check
      _
    $region67: #{tpu_custom_call.1} parent=1 // pred_check_branch
      %135 = sbr.rel (0) target = $region69
    $region68: #{tpu_custom_call.1} parent=1 // pred_region
      %137 = dma.done [#allocation6], 6144
    $region69: #{tpu_custom_call.1} parent=1 // pred_fallthru
      _
    // Predicated region
    $region70: #{tpu_custom_call.1} parent=1 // pred_check
      _
    $region71: #{tpu_custom_call.1} parent=1 // pred_check_branch
      %139 = sbr.rel (0) target = $region73
    $region72: #{tpu_custom_call.1} parent=1 // pred_region
      %141 = dma.done [#allocation6], 48
    $region73: #{tpu_custom_call.1} parent=1 // pred_fallthru
      _
    // Predicated region
    $region74: #{tpu_custom_call.1} parent=1 // pred_check
      _
    $region75: #{tpu_custom_call.1} parent=1 // pred_check_branch
      %143 = sbr.rel (0) target = $region77
    $region76: #{tpu_custom_call.1} parent=1 // pred_region
      %145 = dma.done [#allocation9], 2048
    $region77: #{tpu_custom_call.1} parent=1 // pred_fallthru
      _
    // Predicated region
    $region78: #{tpu_custom_call.1} parent=1 // pred_check
      _
    $region79: #{tpu_custom_call.1} parent=1 // pred_check_branch
      %147 = sbr.rel (0) target = $region81
    $region80: #{tpu_custom_call.1} parent=1 // pred_region
      %149 = dma.done [#allocation9], 2048
    $region81: #{tpu_custom_call.1} parent=1 // pred_fallthru
      _
    // Predicated region
    $region82: #{tpu_custom_call.1} parent=1 // pred_check
      _
    $region83: #{tpu_custom_call.1} parent=1 // pred_check_branch
      %151 = sbr.rel (0) target = $region85
    $region84: #{tpu_custom_call.1} parent=1 // pred_region
      %153 = dma.done [#allocation12], 2048
    $region85: #{tpu_custom_call.1} parent=1 // pred_fallthru
      _
    // Predicated region
    $region86: #{tpu_custom_call.1} parent=1 // pred_check
      _
    $region87: #{tpu_custom_call.1} parent=1 // pred_check_branch
      %155 = sbr.rel (0) target = $region89
    $region88: #{tpu_custom_call.1} parent=1 // pred_region
      %157 = dma.done [#allocation12], 2048
    $region89: #{tpu_custom_call.1} parent=1 // pred_fallthru
      _
    %v158 = vld [vmem:[#allocation2] sm:$0xff]
    %v159 = vld [vmem:[#allocation2 + $0x8] sm:$0xff]
    %v160 = vld [vmem:[#allocation5] sm:$0xff]
    %v161 = vld [vmem:[#allocation5 + $0x8] sm:$0xff]
    %v162 = vld [vmem:[#allocation5 + $0x10] sm:$0xff]
    %v163 = vld [vmem:[#allocation5 + $0x18] sm:$0xff]
    %v164 = vld [vmem:[#allocation5 + $0x20] sm:$0xff]
    %v165 = vld [vmem:[#allocation5 + $0x28] sm:$0xff]
    %v166 = vld [vmem:[#allocation5 + $0x30] sm:$0xff]
    %v167 = vld [vmem:[#allocation5 + $0x38] sm:$0xff]
    %v168 = vld [vmem:[#allocation5 + $0x40] sm:$0xff]
    %v169 = vld [vmem:[#allocation5 + $0x48] sm:$0xff]
    %v170 = vld [vmem:[#allocation5 + $0x50] sm:$0xff]
    %v171 = vld [vmem:[#allocation5 + $0x58] sm:$0xff]
    %v172 = vld [vmem:[#allocation5 + $0x60] sm:$0xff]
    %v173 = vld [vmem:[#allocation5 + $0x68] sm:$0xff]
    %v174 = vld [vmem:[#allocation5 + $0x70] sm:$0xff]
    %v175 = vld [vmem:[#allocation5 + $0x78] sm:$0xff]
    %v176 = vld [vmem:[#allocation5 + $0x80] sm:$0xff]
    %v177 = vld [vmem:[#allocation5 + $0x88] sm:$0xff]
    %v178 = vld [vmem:[#allocation5 + $0x90] sm:$0xff]
    %v179 = vld [vmem:[#allocation5 + $0x98] sm:$0xff]
    %v180 = vld [vmem:[#allocation5 + $0xa0] sm:$0xff]
    %v181 = vld [vmem:[#allocation5 + $0xa8] sm:$0xff]
    %v182 = vld [vmem:[#allocation5 + $0xb0] sm:$0xff]
    %v183 = vld [vmem:[#allocation5 + $0xb8] sm:$0xff]
    %v184 = vld [vmem:[#allocation5 + $0xc0] sm:$0xff]
    %v185 = vld [vmem:[#allocation5 + $0xc8] sm:$0xff]
    %v186 = vld [vmem:[#allocation5 + $0xd0] sm:$0xff]
    %v187 = vld [vmem:[#allocation5 + $0xd8] sm:$0xff]
    %v188 = vld [vmem:[#allocation5 + $0xe0] sm:$0xff]
    %v189 = vld [vmem:[#allocation5 + $0xe8] sm:$0xff]
    %v190 = vld [vmem:[#allocation5 + $0xf0] sm:$0xff]
    %v191 = vld [vmem:[#allocation5 + $0xf8] sm:$0xff]
    %v192 = vld [vmem:[#allocation5 + $0x100] sm:$0xff]
    %v193 = vld [vmem:[#allocation5 + $0x108] sm:$0xff]
    %v194 = vld [vmem:[#allocation5 + $0x110] sm:$0xff]
    %v195 = vld [vmem:[#allocation5 + $0x118] sm:$0xff]
    %v196 = vld [vmem:[#allocation5 + $0x120] sm:$0xff]
    %v197 = vld [vmem:[#allocation5 + $0x128] sm:$0xff]
    %v198 = vld [vmem:[#allocation5 + $0x130] sm:$0xff]
    %v199 = vld [vmem:[#allocation5 + $0x138] sm:$0xff]
    %v200 = vld [vmem:[#allocation5 + $0x140] sm:$0xff]
    %v201 = vld [vmem:[#allocation5 + $0x148] sm:$0xff]
    %v202 = vld [vmem:[#allocation5 + $0x150] sm:$0xff]
    %v203 = vld [vmem:[#allocation5 + $0x158] sm:$0xff]
    %v204 = vld [vmem:[#allocation5 + $0x160] sm:$0xff]
    %v205 = vld [vmem:[#allocation5 + $0x168] sm:$0xff]
    %v206 = vld [vmem:[#allocation5 + $0x170] sm:$0xff]
    %v207 = vld [vmem:[#allocation5 + $0x178] sm:$0xff]
    %v208 = vld [vmem:[#allocation7] sm:$0x7]
    %v210 = vperm.slane %v208, 0
    %v211 = vperm.slane %v208, 1
    %v212 = vperm.slane %v208, 2
    %216 = vmatpush.msra.mxu0 %v205
    %217 = vmatpush.msra.mxu0 %v202
    %218 = vmatpush.msra.mxu0 %v199
    %219 = vmatpush.msra.mxu0 %v196
    %220 = vmatpush.msra.mxu0 %v193
    %221 = vmatpush.msra.mxu0 %v190
    %222 = vmatpush.msra.mxu0 %v187
    %223 = vmatpush.msra.mxu0 %v184
    %224 = vmatpush.msra.mxu0 %v181
    %225 = vmatpush.msra.mxu0 %v178
    %226 = vmatpush.msra.mxu0 %v175
    %227 = vmatpush.msra.mxu0 %v172
    %228 = vmatpush.msra.mxu0 %v169
    %229 = vmatpush.msra.mxu0 %v166
    %230 = vmatpush.msra.mxu0 %v163
    %231 = vmatpush.msra.mxu0 %v160
    %232 = vmatmul.f32.gmra.mxu0 %v158
    %v233 = vpop.f32.mrf.mxu0
    %v234 = vadd.f32 %v210, %v233
    %235 = vmatmul.f32.gmra.mxu0 %v159
    %v236 = vpop.f32.mrf.mxu0
    %v237 = vadd.f32 %v210, %v236
    %238 = vdwg.mxu0
    %239 = vmatpush.msra.mxu0 %v206
    %240 = vmatpush.msra.mxu0 %v203
    %241 = vmatpush.msra.mxu0 %v200
    %242 = vmatpush.msra.mxu0 %v197
    %243 = vmatpush.msra.mxu0 %v194
    %244 = vmatpush.msra.mxu0 %v191
    %245 = vmatpush.msra.mxu0 %v188
    %246 = vmatpush.msra.mxu0 %v185
    %247 = vmatpush.msra.mxu0 %v182
    %248 = vmatpush.msra.mxu0 %v179
    %249 = vmatpush.msra.mxu0 %v176
    %250 = vmatpush.msra.mxu0 %v173
    %251 = vmatpush.msra.mxu0 %v170
    %252 = vmatpush.msra.mxu0 %v167
    %253 = vmatpush.msra.mxu0 %v164
    %254 = vmatpush.msra.mxu0 %v161
    %255 = vmatmul.f32.gmra.mxu0 %v158
    %v256 = vpop.f32.mrf.mxu0
    %v257 = vadd.f32 %v211, %v256
    %258 = vmatmul.f32.gmra.mxu0 %v159
    %v259 = vpop.f32.mrf.mxu0
    %v260 = vadd.f32 %v211, %v259
    %261 = vdwg.mxu0
    %262 = vmatpush.msra.mxu0 %v207
    %263 = vmatpush.msra.mxu0 %v204
    %264 = vmatpush.msra.mxu0 %v201
    %265 = vmatpush.msra.mxu0 %v198
    %266 = vmatpush.msra.mxu0 %v195
    %267 = vmatpush.msra.mxu0 %v192
    %268 = vmatpush.msra.mxu0 %v189
    %269 = vmatpush.msra.mxu0 %v186
    %270 = vmatpush.msra.mxu0 %v183
    %271 = vmatpush.msra.mxu0 %v180
    %272 = vmatpush.msra.mxu0 %v177
    %273 = vmatpush.msra.mxu0 %v174
    %274 = vmatpush.msra.mxu0 %v171
    %275 = vmatpush.msra.mxu0 %v168
    %276 = vmatpush.msra.mxu0 %v165
    %277 = vmatpush.msra.mxu0 %v162
    %278 = vmatmul.f32.gmra.mxu0 %v158
    %v279 = vpop.f32.mrf.mxu0
    %v280 = vadd.f32 %v212, %v279
    %281 = vmatmul.f32.gmra.mxu0 %v159
    %v282 = vpop.f32.mrf.mxu0
    %v283 = vadd.f32 %v212, %v282
    %284 = vdwg.mxu0
    %v285 = vmul.f32 %v234, 0.17677669
    %v286 = vmul.f32 %v237, 0.17677669
    %287 = vmatpush.xpose.msra.mxu0 0.0
    %288 = vmatpush.xpose.msra.mxu0 0.0
    %289 = vmatpush.xpose.msra.mxu0 0.0
    %290 = vmatpush.xpose.msra.mxu0 0.0
    %291 = vmatpush.xpose.msra.mxu0 0.0
    %292 = vmatpush.xpose.msra.mxu0 0.0
    %293 = vmatpush.xpose.msra.mxu0 0.0
    %294 = vmatpush.xpose.msra.mxu0 0.0
    %295 = vmatpush.xpose.msra.mxu0 0.0
    %296 = vmatpush.xpose.msra.mxu0 0.0
    %297 = vmatpush.xpose.msra.mxu0 0.0
    %298 = vmatpush.xpose.msra.mxu0 0.0
    %299 = vmatpush.xpose.msra.mxu0 0.0
    %300 = vmatpush.xpose.msra.mxu0 0.0
    %301 = vmatpush.xpose.msra.mxu0 0.0
    %302 = vmatpush.xpose.msra.mxu0 %v257
    %303 = vmatmul.f32.gmra.mxu0 %v285
    %v304 = vpop.f32.mrf.mxu0
    %v305 = vadd.f32 0.0, %v304
    %306 = vdwg.mxu0
    %307 = vmatpush.xpose.msra.mxu0 0.0
    %308 = vmatpush.xpose.msra.mxu0 0.0
    %309 = vmatpush.xpose.msra.mxu0 0.0
    %310 = vmatpush.xpose.msra.mxu0 0.0
    %311 = vmatpush.xpose.msra.mxu0 0.0
    %312 = vmatpush.xpose.msra.mxu0 0.0
    %313 = vmatpush.xpose.msra.mxu0 0.0
    %314 = vmatpush.xpose.msra.mxu0 0.0
    %315 = vmatpush.xpose.msra.mxu0 0.0
    %316 = vmatpush.xpose.msra.mxu0 0.0
    %317 = vmatpush.xpose.msra.mxu0 0.0
    %318 = vmatpush.xpose.msra.mxu0 0.0
    %319 = vmatpush.xpose.msra.mxu0 0.0
    %320 = vmatpush.xpose.msra.mxu0 0.0
    %321 = vmatpush.xpose.msra.mxu0 0.0
    %322 = vmatpush.xpose.msra.mxu0 %v260
    %323 = vmatmul.f32.gmra.mxu0 %v286
    %v324 = vpop.f32.mrf.mxu0
    %v325 = vadd.f32 0.0, %v324
    %326 = vdwg.mxu0
    %vm327 = vcmask 64512
    %v328 = vsel %vm327, %v305, -inf
    %329 = vmax.xlane.f32.xlu0 %v328
    %v330 = vpop.xlane.xlu0 %329
    %v331 = vsel %vm327, %v325, -inf
    %332 = vmax.xlane.f32.xlu0 %v331
    %v333 = vpop.xlane.xlu0 %332
    %v334 = vsub.f32 %v305, %v330
    %v335 = vsub.f32 %v325, %v333
    %v336 = vmul.f32 %v334, 1.442695
    %v337 = vpow.pop %v336
    %v338 = vmul.f32 %v335, 1.442695
    %v339 = vpow.pop %v338
    %v340 = vsel %vm327, %v337, 0.0
    %341 = vadd.xlane.f32.xlu0 %v340
    %v342 = vpop.xlane.xlu0 %341
    %v343 = vsel %vm327, %v339, 0.0
    %344 = vadd.xlane.f32.xlu0 %v343
    %v345 = vpop.xlane.xlu0 %344
    %v346 = vrcp.pop %v342
    %v347 = vrcp.pop %v345
    %v348 = vmul.f32 %v337, %v346
    %v349 = vmul.f32 %v339, %v347
    %v351 = vsel %vm327, %v348, 0
    %353 = vmatpush.msra.mxu0 0.0
    %354 = vmatpush.msra.mxu0 0.0
    %355 = vmatpush.msra.mxu0 0.0
    %356 = vmatpush.msra.mxu0 0.0
    %357 = vmatpush.msra.mxu0 0.0
    %358 = vmatpush.msra.mxu0 0.0
    %359 = vmatpush.msra.mxu0 0.0
    %360 = vmatpush.msra.mxu0 0.0
    %361 = vmatpush.msra.mxu0 0.0
    %362 = vmatpush.msra.mxu0 0.0
    %363 = vmatpush.msra.mxu0 0.0
    %364 = vmatpush.msra.mxu0 0.0
    %365 = vmatpush.msra.mxu0 0.0
    %366 = vmatpush.msra.mxu0 0.0
    %367 = vmatpush.msra.mxu0 0.0
    %368 = vmatpush.msra.mxu0 %v280
    %369 = vmatmul.f32.gmra.mxu0 %v351
    %v370 = vpop.f32.mrf.mxu0
    %v371 = vadd.f32 0.0, %v370
    %372 = vdwg.mxu0
    %v374 = vsel %vm327, %v349, 0
    %376 = vmatpush.msra.mxu0 0.0
    %377 = vmatpush.msra.mxu0 0.0
    %378 = vmatpush.msra.mxu0 0.0
    %379 = vmatpush.msra.mxu0 0.0
    %380 = vmatpush.msra.mxu0 0.0
    %381 = vmatpush.msra.mxu0 0.0
    %382 = vmatpush.msra.mxu0 0.0
    %383 = vmatpush.msra.mxu0 0.0
    %384 = vmatpush.msra.mxu0 0.0
    %385 = vmatpush.msra.mxu0 0.0
    %386 = vmatpush.msra.mxu0 0.0
    %387 = vmatpush.msra.mxu0 0.0
    %388 = vmatpush.msra.mxu0 0.0
    %389 = vmatpush.msra.mxu0 0.0
    %390 = vmatpush.msra.mxu0 0.0
    %391 = vmatpush.msra.mxu0 %v283
    %392 = vmatmul.f32.gmra.mxu0 %v374
    %v393 = vpop.f32.mrf.mxu0
    %v394 = vadd.f32 0.0, %v393
    %395 = vdwg.mxu0
    %v396 = vld [vmem:[#allocation8] sm:$0xff]
    %v397 = vld [vmem:[#allocation8 + $0x8] sm:$0xff]
    %v398 = vld [vmem:[#allocation8 + $0x10] sm:$0xff]
    %v399 = vld [vmem:[#allocation8 + $0x18] sm:$0xff]
    %v400 = vld [vmem:[#allocation8 + $0x20] sm:$0xff]
    %v401 = vld [vmem:[#allocation8 + $0x28] sm:$0xff]
    %v402 = vld [vmem:[#allocation8 + $0x30] sm:$0xff]
    %v403 = vld [vmem:[#allocation8 + $0x38] sm:$0xff]
    %v404 = vld [vmem:[#allocation8 + $0x40] sm:$0xff]
    %v405 = vld [vmem:[#allocation8 + $0x48] sm:$0xff]
    %v406 = vld [vmem:[#allocation8 + $0x50] sm:$0xff]
    %v407 = vld [vmem:[#allocation8 + $0x58] sm:$0xff]
    %v408 = vld [vmem:[#allocation8 + $0x60] sm:$0xff]
    %v409 = vld [vmem:[#allocation8 + $0x68] sm:$0xff]
    %v410 = vld [vmem:[#allocation8 + $0x70] sm:$0xff]
    %v411 = vld [vmem:[#allocation8 + $0x78] sm:$0xff]
    %v412 = vld [vmem:[%s4] sm:$0x1]
    %v414 = vperm.slane %v412, 0
    %416 = vmatpush.msra.mxu0 %v411
    %417 = vmatpush.msra.mxu0 %v410
    %418 = vmatpush.msra.mxu0 %v409
    %419 = vmatpush.msra.mxu0 %v408
    %420 = vmatpush.msra.mxu0 %v407
    %421 = vmatpush.msra.mxu0 %v406
    %422 = vmatpush.msra.mxu0 %v405
    %423 = vmatpush.msra.mxu0 %v404
    %424 = vmatpush.msra.mxu0 %v403
    %425 = vmatpush.msra.mxu0 %v402
    %426 = vmatpush.msra.mxu0 %v401
    %427 = vmatpush.msra.mxu0 %v400
    %428 = vmatpush.msra.mxu0 %v399
    %429 = vmatpush.msra.mxu0 %v398
    %430 = vmatpush.msra.mxu0 %v397
    %431 = vmatpush.msra.mxu0 %v396
    %432 = vmatmul.f32.gmra.mxu0 %v371
    %v433 = vpop.f32.mrf.mxu0
    %v434 = vadd.f32 %v414, %v433
    %435 = vmatmul.f32.gmra.mxu0 %v394
    %v436 = vpop.f32.mrf.mxu0
    %v437 = vadd.f32 %v414, %v436
    %438 = vdwg.mxu0
    %v439 = vadd.f32 %v158, %v434
    %v440 = vadd.f32 %v159, %v437
    %v441 = vld [vmem:[%s5] sm:$0x1]
    %v442 = vld [vmem:[%s6] sm:$0x1]
    %443 = vadd.xlane.f32.xlu0 %v439
    %v444 = vpop.xlane.xlu0 %443
    %445 = vadd.xlane.f32.xlu0 %v440
    %v446 = vpop.xlane.xlu0 %445
    %v447 = vmul.f32 %v444, 0.03125
    %v448 = vmul.f32 %v446, 0.03125
    %v449 = vmul.f32 %v439, %v439
    %v450 = vmul.f32 %v440, %v440
    %451 = vadd.xlane.f32.xlu0 %v449
    %v452 = vpop.xlane.xlu0 %451
    %453 = vadd.xlane.f32.xlu0 %v450
    %v454 = vpop.xlane.xlu0 %453
    %v455 = vmul.f32 %v452, 0.03125
    %v456 = vmul.f32 %v454, 0.03125
    %v457 = vmul.f32 %v447, %v447
    %v458 = vmul.f32 %v448, %v448
    %v459 = vsub.f32 %v455, %v457
    %v460 = vsub.f32 %v456, %v458
    %v461 = vsub.f32 %v439, %v447
    %v462 = vsub.f32 %v440, %v448
    %v463 = vadd.f32 %v459, 1e-05
    %v464 = vadd.f32 %v460, 1e-05
    %v465 = vrsqrt.pop %v463
    %v466 = vmul.f32 %v465, %v463
    %v467 = vmul.f32 %v466, %v465
    %v468 = vmul.f32 0.5, %v467
    %v469 = vsub.f32 1.5, %v468
    %v470 = vmul.f32 %v465, %v469
    %vm471 = vweird.f32 %v463
    %vm472 = vweird.f32 %v465
    %vm473 = vmor %vm471, %vm472
    %v474 = vsel %vm473, %v465, %v470
    %v475 = vrsqrt.pop %v464
    %v476 = vmul.f32 %v475, %v464
    %v477 = vmul.f32 %v476, %v475
    %v478 = vmul.f32 0.5, %v477
    %v479 = vsub.f32 1.5, %v478
    %v480 = vmul.f32 %v475, %v479
    %vm481 = vweird.f32 %v464
    %vm482 = vweird.f32 %v475
    %vm483 = vmor %vm481, %vm482
    %v484 = vsel %vm483, %v475, %v480
    %v485 = vmul.f32 %v461, %v474
    %v486 = vmul.f32 %v462, %v484
    %v488 = vperm.slane %v441, 0
    %v490 = vmul.f32 %v485, %v488
    %v491 = vmul.f32 %v486, %v488
    %v493 = vperm.slane %v442, 0
    %v495 = vadd.f32 %v490, %v493
    %v496 = vadd.f32 %v491, %v493
    %v497 = vld [vmem:[#allocation10] sm:$0xff]
    %v498 = vld [vmem:[#allocation10 + $0x8] sm:$0xff]
    %v499 = vld [vmem:[#allocation10 + $0x10] sm:$0xff]
    %v500 = vld [vmem:[#allocation10 + $0x18] sm:$0xff]
    %v501 = vld [vmem:[#allocation10 + $0x20] sm:$0xff]
    %v502 = vld [vmem:[#allocation10 + $0x28] sm:$0xff]
    %v503 = vld [vmem:[#allocation10 + $0x30] sm:$0xff]
    %v504 = vld [vmem:[#allocation10 + $0x38] sm:$0xff]
    %v505 = vld [vmem:[#allocation10 + $0x40] sm:$0xff]
    %v506 = vld [vmem:[#allocation10 + $0x48] sm:$0xff]
    %v507 = vld [vmem:[#allocation10 + $0x50] sm:$0xff]
    %v508 = vld [vmem:[#allocation10 + $0x58] sm:$0xff]
    %v509 = vld [vmem:[#allocation10 + $0x60] sm:$0xff]
    %v510 = vld [vmem:[#allocation10 + $0x68] sm:$0xff]
    %v511 = vld [vmem:[#allocation10 + $0x70] sm:$0xff]
    %v512 = vld [vmem:[#allocation10 + $0x78] sm:$0xff]
    %v513 = vld [vmem:[%s8] sm:$0x1]
    %v515 = vperm.slane %v513, 0
    %517 = vmatpush.msra.mxu0 %v512
    %518 = vmatpush.msra.mxu0 %v511
    %519 = vmatpush.msra.mxu0 %v510
    %520 = vmatpush.msra.mxu0 %v509
    %521 = vmatpush.msra.mxu0 %v508
    %522 = vmatpush.msra.mxu0 %v507
    %523 = vmatpush.msra.mxu0 %v506
    %524 = vmatpush.msra.mxu0 %v505
    %525 = vmatpush.msra.mxu0 %v504
    %526 = vmatpush.msra.mxu0 %v503
    %527 = vmatpush.msra.mxu0 %v502
    %528 = vmatpush.msra.mxu0 %v501
    %529 = vmatpush.msra.mxu0 %v500
    %530 = vmatpush.msra.mxu0 %v499
    %531 = vmatpush.msra.mxu0 %v498
    %532 = vmatpush.msra.mxu0 %v497
    %533 = vmatmul.f32.gmra.mxu0 %v495
    %v534 = vpop.f32.mrf.mxu0
    %v535 = vadd.f32 %v515, %v534
    %536 = vmatmul.f32.gmra.mxu0 %v496
    %v537 = vpop.f32.mrf.mxu0
    %v538 = vadd.f32 %v515, %v537
    %539 = vdwg.mxu0
    %v540 = vmax.f32 %v535, 0.0
    %v541 = vmax.f32 %v538, 0.0
    %v542 = vld [vmem:[#allocation11] sm:$0xff]
    %v543 = vld [vmem:[#allocation11 + $0x8] sm:$0xff]
    %v544 = vld [vmem:[#allocation11 + $0x10] sm:$0xff]
    %v545 = vld [vmem:[#allocation11 + $0x18] sm:$0xff]
    %v546 = vld [vmem:[#allocation11 + $0x20] sm:$0xff]
    %v547 = vld [vmem:[#allocation11 + $0x28] sm:$0xff]
    %v548 = vld [vmem:[#allocation11 + $0x30] sm:$0xff]
    %v549 = vld [vmem:[#allocation11 + $0x38] sm:$0xff]
    %v550 = vld [vmem:[#allocation11 + $0x40] sm:$0xff]
    %v551 = vld [vmem:[#allocation11 + $0x48] sm:$0xff]
    %v552 = vld [vmem:[#allocation11 + $0x50] sm:$0xff]
    %v553 = vld [vmem:[#allocation11 + $0x58] sm:$0xff]
    %v554 = vld [vmem:[#allocation11 + $0x60] sm:$0xff]
    %v555 = vld [vmem:[#allocation11 + $0x68] sm:$0xff]
    %v556 = vld [vmem:[#allocation11 + $0x70] sm:$0xff]
    %v557 = vld [vmem:[#allocation11 + $0x78] sm:$0xff]
    %v558 = vld [vmem:[%s10] sm:$0x1]
    %v560 = vperm.slane %v558, 0
    %562 = vmatpush.msra.mxu0 %v557
    %563 = vmatpush.msra.mxu0 %v556
    %564 = vmatpush.msra.mxu0 %v555
    %565 = vmatpush.msra.mxu0 %v554
    %566 = vmatpush.msra.mxu0 %v553
    %567 = vmatpush.msra.mxu0 %v552
    %568 = vmatpush.msra.mxu0 %v551
    %569 = vmatpush.msra.mxu0 %v550
    %570 = vmatpush.msra.mxu0 %v549
    %571 = vmatpush.msra.mxu0 %v548
    %572 = vmatpush.msra.mxu0 %v547
    %573 = vmatpush.msra.mxu0 %v546
    %574 = vmatpush.msra.mxu0 %v545
    %575 = vmatpush.msra.mxu0 %v544
    %576 = vmatpush.msra.mxu0 %v543
    %577 = vmatpush.msra.mxu0 %v542
    %578 = vmatmul.f32.gmra.mxu0 %v540
    %v579 = vpop.f32.mrf.mxu0
    %v580 = vadd.f32 %v560, %v579
    %581 = vmatmul.f32.gmra.mxu0 %v541
    %v582 = vpop.f32.mrf.mxu0
    %v583 = vadd.f32 %v560, %v582
    %584 = vdwg.mxu0
    %v585 = vadd.f32 %v495, %v580
    %v586 = vadd.f32 %v496, %v583
    %v587 = vld [vmem:[%s11] sm:$0x1]
    %v588 = vld [vmem:[%s12] sm:$0x1]
    %589 = vadd.xlane.f32.xlu0 %v585
    %v590 = vpop.xlane.xlu0 %589
    %591 = vadd.xlane.f32.xlu0 %v586
    %v592 = vpop.xlane.xlu0 %591
    %v593 = vmul.f32 %v590, 0.03125
    %v594 = vmul.f32 %v592, 0.03125
    %v595 = vmul.f32 %v585, %v585
    %v596 = vmul.f32 %v586, %v586
    %597 = vadd.xlane.f32.xlu0 %v595
    %v598 = vpop.xlane.xlu0 %597
    %599 = vadd.xlane.f32.xlu0 %v596
    %v600 = vpop.xlane.xlu0 %599
    %v601 = vmul.f32 %v598, 0.03125
    %v602 = vmul.f32 %v600, 0.03125
    %v603 = vmul.f32 %v593, %v593
    %v604 = vmul.f32 %v594, %v594
    %v605 = vsub.f32 %v601, %v603
    %v606 = vsub.f32 %v602, %v604
    %v607 = vsub.f32 %v585, %v593
    %v608 = vsub.f32 %v586, %v594
    %v609 = vadd.f32 %v605, 1e-05
    %v610 = vadd.f32 %v606, 1e-05
    %v611 = vrsqrt.pop %v609
    %v612 = vmul.f32 %v611, %v609
    %v613 = vmul.f32 %v612, %v611
    %v614 = vmul.f32 0.5, %v613
    %v615 = vsub.f32 1.5, %v614
    %v616 = vmul.f32 %v611, %v615
    %vm617 = vweird.f32 %v609
    %vm618 = vweird.f32 %v611
    %vm619 = vmor %vm617, %vm618
    %v620 = vsel %vm619, %v611, %v616
    %v621 = vrsqrt.pop %v610
    %v622 = vmul.f32 %v621, %v610
    %v623 = vmul.f32 %v622, %v621
    %v624 = vmul.f32 0.5, %v623
    %v625 = vsub.f32 1.5, %v624
    %v626 = vmul.f32 %v621, %v625
    %vm627 = vweird.f32 %v610
    %vm628 = vweird.f32 %v621
    %vm629 = vmor %vm627, %vm628
    %v630 = vsel %vm629, %v621, %v626
    %v631 = vmul.f32 %v607, %v620
    %v632 = vmul.f32 %v608, %v630
    %v634 = vperm.slane %v587, 0
    %v636 = vmul.f32 %v631, %v634
    %v637 = vmul.f32 %v632, %v634
    %v639 = vperm.slane %v588, 0
    %v641 = vadd.f32 %v636, %v639
    %v642 = vadd.f32 %v637, %v639
    %v643 = vld [vmem:[#allocation13] sm:$0xff]
    %v644 = vld [vmem:[#allocation13 + $0x8] sm:$0xff]
    %v645 = vld [vmem:[#allocation13 + $0x10] sm:$0xff]
    %v646 = vld [vmem:[#allocation13 + $0x18] sm:$0xff]
    %v647 = vld [vmem:[#allocation13 + $0x20] sm:$0xff]
    %v648 = vld [vmem:[#allocation13 + $0x28] sm:$0xff]
    %v649 = vld [vmem:[#allocation13 + $0x30] sm:$0xff]
    %v650 = vld [vmem:[#allocation13 + $0x38] sm:$0xff]
    %v651 = vld [vmem:[#allocation13 + $0x40] sm:$0xff]
    %v652 = vld [vmem:[#allocation13 + $0x48] sm:$0xff]
    %v653 = vld [vmem:[#allocation13 + $0x50] sm:$0xff]
    %v654 = vld [vmem:[#allocation13 + $0x58] sm:$0xff]
    %v655 = vld [vmem:[#allocation13 + $0x60] sm:$0xff]
    %v656 = vld [vmem:[#allocation13 + $0x68] sm:$0xff]
    %v657 = vld [vmem:[#allocation13 + $0x70] sm:$0xff]
    %v658 = vld [vmem:[#allocation13 + $0x78] sm:$0xff]
    %v659 = vld [vmem:[%s14] sm:$0x1]
    %v661 = vperm.slane %v659, 0
    %663 = vmatpush.msra.mxu0 %v658
    %664 = vmatpush.msra.mxu0 %v657
    %665 = vmatpush.msra.mxu0 %v656
    %666 = vmatpush.msra.mxu0 %v655
    %667 = vmatpush.msra.mxu0 %v654
    %668 = vmatpush.msra.mxu0 %v653
    %669 = vmatpush.msra.mxu0 %v652
    %670 = vmatpush.msra.mxu0 %v651
    %671 = vmatpush.msra.mxu0 %v650
    %672 = vmatpush.msra.mxu0 %v649
    %673 = vmatpush.msra.mxu0 %v648
    %674 = vmatpush.msra.mxu0 %v647
    %675 = vmatpush.msra.mxu0 %v646
    %676 = vmatpush.msra.mxu0 %v645
    %677 = vmatpush.msra.mxu0 %v644
    %678 = vmatpush.msra.mxu0 %v643
    %679 = vmatmul.f32.gmra.mxu0 %v641
    %v680 = vpop.f32.mrf.mxu0
    %v681 = vadd.f32 %v661, %v680
    %682 = vmatmul.f32.gmra.mxu0 %v642
    %v683 = vpop.f32.mrf.mxu0
    %v684 = vadd.f32 %v661, %v683
    %685 = vdwg.mxu0
    %686 = vst [vmem:[#allocation14] sm:$0xff] %v681
    %687 = vst [vmem:[#allocation14 + $0x8] sm:$0xff] %v684
    // Predicated region
    $region90: #{tpu_custom_call.1} parent=1 // pred_check
      _
    $region91: #{tpu_custom_call.1} parent=1 // pred_check_branch
      %689 = sbr.rel (0) target = $region93
    $region92: #{tpu_custom_call.1} parent=1 // pred_region
      %691 = vsyncadd [#allocation4], 0
      %s692 = sshll.u32 [#allocation14], 4
      %s693 = int_to_ptr.vmem [resolvable:$true] %s692
      %s694 = sshll.u32 %s15, 4
      %s695 = int_to_ptr.hbm [resolvable:$true] %s694
      %700 = dma.vmem_to_hbm [thread:$0]  %s693, 256, %s695, [#allocation4], 128, 128, 8
    $region93: #{tpu_custom_call.1} parent=1 // pred_fallthru
      _
    // Predicated region
    $region94: #{tpu_custom_call.1} parent=1 // pred_check
      _
    $region95: #{tpu_custom_call.1} parent=1 // pred_check_branch
      %702 = sbr.rel (0) target = $region97
    $region96: #{tpu_custom_call.1} parent=1 // pred_region
      %704 = dma.done [#allocation4], 256
    $region97: #{tpu_custom_call.1} parent=1 // pred_fallthru
      _
    %705 = vsyncpa [#allocation3], 1
    %706 = vsyncpa [#allocation6], 1
    %707 = vsyncpa [#allocation9], 1
    %708 = vsyncpa [#allocation12], 1
    %709 = vsyncpa [#allocation4], 1

</llo_original>
